<compile_context>
chip_gen: v7x
topology: tpu7x:2x2x1
jax: 0.10.0
libtpu: 0.0.40
codegen_flags: <defaults>
</compile_context>

<pallas_src>
import jax
import jax.numpy as jnp
import numpy as np
from jax.experimental import pallas as pl
from jax.experimental.pallas import tpu as pltpu


def multi_easy_attn_kernel(
    x_ref,      # (1, T, D)   full sequence of the current batch (compute dtype)
    wv_ref,     # (D, D)      v_proj weight, already transposed to (in, out)
    a_ref,      # (H, Tq, T)  pre-masked per-head attention scores (q tile)
    o_ref,      # (1, Tq, D)  output tile
    v_scratch,  # (T, D)      VMEM scratch holding v for the whole sequence
):
    qi = pl.program_id(1)

    # v = x @ Wv^T is identical for every q tile of a batch: compute it once
    # per batch (qi == 0) with a single full-width MXU matmul and reuse it.
    @pl.when(qi == 0)
    def _():
        v_scratch[...] = jnp.dot(
            x_ref[0], wv_ref[...], preferred_element_type=jnp.float32
        ).astype(v_scratch.dtype)

    v = v_scratch[...]                       # (T, D)
    H = a_ref.shape[0]
    hd = v.shape[1] // H

    # Per-head contraction, written straight into the output lane slice
    # (no concatenate, no extra relayout buffer). For real model sizes keep
    # hd a multiple of 128 so these stores stay lane-dense.
    for i in range(H):
        head = jnp.dot(
            a_ref[i],                        # (Tq, T)
            v[:, i * hd:(i + 1) * hd],       # (T, hd)
            preferred_element_type=jnp.float32,
        )
        o_ref[0, :, i * hd:(i + 1) * hd] = head.astype(o_ref.dtype)


def multi_easy_attn(
    x,            # (B, T, D) activations
    wv_t,         # (D, D)    v_proj weight transposed: torch weight.T (in, out)
    alphas,       # (H, T, T) stacked per-head learnable scores
    mask=None,    # (T, T)    lower-triangular mask (or None)
    *,
    use_mask=True,
    compute_dtype=jnp.bfloat16,   # MXU operand dtype; f32 path for validation
    block_q=None,                 # q-tile size along the sequence axis
):
    B, T, D = x.shape
    H = alphas.shape[0]
    assert D % H == 0, "dim must be divisible by nheads"

    if block_q is None:
        block_q = T if T <= 256 else 256
    assert T % block_q == 0, "T must be divisible by block_q"
    assert block_q == T or block_q % 8 == 0, "block_q must be sublane-aligned"
    num_q = T // block_q

    # Batch-invariant masking hoisted out of the kernel (done once by XLA).
    masked_alpha = alphas * mask if (use_mask and mask is not None) else alphas

    x_c = x.astype(compute_dtype)
    wv_c = wv_t.astype(compute_dtype)
    a_c = masked_alpha.astype(compute_dtype)

    flops = int(B * (2 * T * D * D + 2 * T * T * D))
    bytes_accessed = int(
        x_c.size * x_c.dtype.itemsize
        + wv_c.size * wv_c.dtype.itemsize
        + a_c.size * a_c.dtype.itemsize
        + B * T * D * x.dtype.itemsize
    )

    return pl.pallas_call(
        multi_easy_attn_kernel,
        out_shape=jax.ShapeDtypeStruct((B, T, D), x.dtype),
        grid_spec=pltpu.PrefetchScalarGridSpec(
            num_scalar_prefetch=0,
            grid=(B, num_q),
            in_specs=[
                # full sequence of the current batch (constant across q tiles,
                # so it is DMA'd once per batch)
                pl.BlockSpec((1, T, D), lambda b, q: (b, 0, 0)),
                # grid-invariant v_proj weight
                pl.BlockSpec((D, D), lambda b, q: (0, 0)),
                # q-tile of the pre-masked alphas (all heads, all keys)
                pl.BlockSpec((H, block_q, T), lambda b, q: (0, q, 0)),
            ],
            out_specs=pl.BlockSpec((1, block_q, D), lambda b, q: (b, q, 0)),
            scratch_shapes=[pltpu.VMEM((T, D), compute_dtype)],
        ),
        compiler_params=pltpu.CompilerParams(
            dimension_semantics=("parallel", "arbitrary"),
            vmem_limit_bytes=48 * 1024 * 1024,
        ),
        cost_estimate=pl.CostEstimate(
            flops=flops, transcendentals=0, bytes_accessed=bytes_accessed
        ),
    )(x_c, wv_c, a_c)


# ------------------------- pure-JAX reference -------------------------
def reference_multi_easy_attn(x, wv_t, alphas, mask, use_mask=True):
    B, T, D = x.shape
    H = alphas.shape[0]
    hd = D // H
    v = x @ wv_t
    outs = []
    for i in range(H):
        att = alphas[i] * mask if use_mask else alphas[i]
        outs.append(jnp.einsum("qk,bkd->bqd", att, v[..., i * hd:(i + 1) * hd]))
    return jnp.concatenate(outs, axis=-1)


if __name__ == "__main__":
    # Small shapes consistent with LearnFormerArgs (bsz, cntx, dim, nheads).
    B, T, D, H = 2, 8, 32, 2

    key = jax.random.PRNGKey(0)
    k1, k2, k3 = jax.random.split(key, 3)

    x = jax.random.normal(k1, (B, T, D), jnp.float32)
    wv_t = jax.random.normal(k2, (D, D), jnp.float32) * 0.1      # torch weight.T
    alphas = jax.random.uniform(k3, (H, T, T), jnp.float32)      # stacked alpha_i
    mask = jnp.tril(jnp.ones((T, T), jnp.float32))

    ref = jax.block_until_ready(reference_multi_easy_attn(x, wv_t, alphas, mask))

    # f32 MXU path: bit-for-bit-close to the torch/f32 reference.
    out_f32 = jax.block_until_ready(
        multi_easy_attn(x, wv_t, alphas, mask, compute_dtype=jnp.float32)
    )
    np.testing.assert_allclose(np.asarray(out_f32), np.asarray(ref),
                               rtol=1e-5, atol=1e-5)

    # Default bf16 MXU path: looser tolerance (bf16 operand rounding).
    out_bf16 = jax.block_until_ready(multi_easy_attn(x, wv_t, alphas, mask))
    np.testing.assert_allclose(np.asarray(out_bf16), np.asarray(ref),
                               rtol=5e-2, atol=5e-2)

    print("KERNEL_OK")
</pallas_src>

<mosaic_0001>
module attributes {stable_mosaic.version = 11 : i64} {
  func.func @multi_easy_attn_kernel(%arg0: i32, %arg1: i32, %arg2: memref<1x8x32xf32, #tpu.memory_space<vmem>>, %arg3: memref<32x32xf32, #tpu.memory_space<vmem>>, %arg4: memref<2x8x8xf32, #tpu.memory_space<vmem>>, %arg5: memref<1x8x32xf32, #tpu.memory_space<vmem>>, %arg6: memref<8x32xf32, #tpu.memory_space<vmem>>) attributes {dimension_semantics = [#tpu.dimension_semantics<parallel>, #tpu.dimension_semantics<arbitrary>], iteration_bounds = array<i64: 2, 1>, scalar_prefetch = 0 : i64, scratch_operands = 1 : i64, tpu.core_type = #tpu.core_type<tc>, window_params = [{transform_indices = @transform_0, window_bounds = array<i64: 1, 8, 32>}, {pipeline_mode = #tpu.pipeline_mode<synchronous>, transform_indices = @transform_1, window_bounds = array<i64: 32, 32>}, {transform_indices = @transform_2, window_bounds = array<i64: 2, 8, 8>}, {transform_indices = @transform_3, window_bounds = array<i64: 1, 8, 32>}]} {
    %c0_i32 = arith.constant 0 : i32
    %0 = arith.cmpi eq, %arg1, %c0_i32 : i32
    %1 = arith.extui %0 : i1 to i32
    %c0_i32_0 = arith.constant 0 : i32
    %2 = arith.cmpi ne, %1, %c0_i32_0 : i32
    scf.if %2 {
      %c0_13 = arith.constant 0 : index
      %c0_14 = arith.constant 0 : index
      %c0_15 = arith.constant 0 : index
      %18 = vector.load %arg2[%c0_13, %c0_14, %c0_15] : memref<1x8x32xf32, #tpu.memory_space<vmem>>, vector<1x8x32xf32>
      %19 = vector.shape_cast %18 : vector<1x8x32xf32> to vector<8x32xf32>
      %c0_16 = arith.constant 0 : index
      %c0_17 = arith.constant 0 : index
      %20 = vector.load %arg3[%c0_16, %c0_17] : memref<32x32xf32, #tpu.memory_space<vmem>>, vector<32x32xf32>
      %cst_18 = arith.constant dense<0.000000e+00> : vector<8x32xf32>
      %21 = tpu.matmul %19, %20, %cst_18 {dimension_numbers = #tpu.dot_dimension_numbers<[1], [0], [0], [1], [0, 0, 1, 1], [], []>} : vector<8x32xf32>, vector<32x32xf32>, vector<8x32xf32> -> vector<8x32xf32>
      %c0_19 = arith.constant 0 : index
      %c0_20 = arith.constant 0 : index
      %22 = vector.load %arg6[%c0_19, %c0_20] : memref<8x32xf32, #tpu.memory_space<vmem>>, vector<8x32xf32>
      tpu.vector_store %arg6[%c0_19, %c0_20], %21 {strides = array<i32>} : memref<8x32xf32, #tpu.memory_space<vmem>>, vector<8x32xf32>,
    } else {
    }
    %c0 = arith.constant 0 : index
    %c0_1 = arith.constant 0 : index
    %3 = vector.load %arg6[%c0, %c0_1] : memref<8x32xf32, #tpu.memory_space<vmem>>, vector<8x32xf32>
    %c0_2 = arith.constant 0 : index
    %c0_3 = arith.constant 0 : index
    %c0_4 = arith.constant 0 : index
    %4 = vector.load %arg4[%c0_2, %c0_3, %c0_4] : memref<2x8x8xf32, #tpu.memory_space<vmem>>, vector<1x8x8xf32>
    %5 = vector.shape_cast %4 : vector<1x8x8xf32> to vector<8x8xf32>
    %6 = vector.extract_strided_slice %3 {offsets = [0, 0], sizes = [8, 16], strides = [1, 1]} : vector<8x32xf32> to vector<8x16xf32>
    %cst = arith.constant dense<0.000000e+00> : vector<8x16xf32>
    %7 = tpu.matmul %5, %6, %cst {dimension_numbers = #tpu.dot_dimension_numbers<[1], [0], [0], [1], [0, 0, 1, 1], [], []>} : vector<8x8xf32>, vector<8x16xf32>, vector<8x16xf32> -> vector<8x16xf32>
    %c0_5 = arith.constant 0 : index
    %c0_6 = arith.constant 0 : index
    %c0_7 = arith.constant 0 : index
    %8 = vector.load %arg5[%c0_5, %c0_6, %c0_7] : memref<1x8x32xf32, #tpu.memory_space<vmem>>, vector<1x8x16xf32>
    %9 = vector.shape_cast %8 : vector<1x8x16xf32> to vector<8x16xf32>
    %10 = vector.shape_cast %7 : vector<8x16xf32> to vector<1x8x16xf32>
    tpu.vector_store %arg5[%c0_5, %c0_6, %c0_7], %10 {strides = array<i32>} : memref<1x8x32xf32, #tpu.memory_space<vmem>>, vector<1x8x16xf32>,
    %c1 = arith.constant 1 : index
    %c0_8 = arith.constant 0 : index
    %c0_9 = arith.constant 0 : index
    %11 = vector.load %arg4[%c1, %c0_8, %c0_9] : memref<2x8x8xf32, #tpu.memory_space<vmem>>, vector<1x8x8xf32>
    %12 = vector.shape_cast %11 : vector<1x8x8xf32> to vector<8x8xf32>
    %13 = vector.extract_strided_slice %3 {offsets = [0, 16], sizes = [8, 16], strides = [1, 1]} : vector<8x32xf32> to vector<8x16xf32>
    %cst_10 = arith.constant dense<0.000000e+00> : vector<8x16xf32>
    %14 = tpu.matmul %12, %13, %cst_10 {dimension_numbers = #tpu.dot_dimension_numbers<[1], [0], [0], [1], [0, 0, 1, 1], [], []>} : vector<8x8xf32>, vector<8x16xf32>, vector<8x16xf32> -> vector<8x16xf32>
    %c0_11 = arith.constant 0 : index
    %c0_12 = arith.constant 0 : index
    %c16 = arith.constant 16 : index
    %15 = vector.load %arg5[%c0_11, %c0_12, %c16] : memref<1x8x32xf32, #tpu.memory_space<vmem>>, vector<1x8x16xf32>
    %16 = vector.shape_cast %15 : vector<1x8x16xf32> to vector<8x16xf32>
    %17 = vector.shape_cast %14 : vector<8x16xf32> to vector<1x8x16xf32>
    tpu.vector_store %arg5[%c0_11, %c0_12, %c16], %17 {strides = array<i32>} : memref<1x8x32xf32, #tpu.memory_space<vmem>>, vector<1x8x16xf32>,
    return
  }
  func.func @transform_0(%arg0: i32, %arg1: i32) -> (i32, i32, i32) {
    %c0_i32 = arith.constant 0 : i32
    %c0_i32_0 = arith.constant 0 : i32
    %c0_i32_1 = arith.constant 0 : i32
    return %arg0, %c0_i32, %c0_i32_0 : i32, i32, i32
  }
  func.func @transform_1(%arg0: i32, %arg1: i32) -> (i32, i32) {
    %c0_i32 = arith.constant 0 : i32
    %c0_i32_0 = arith.constant 0 : i32
    %c0_i32_1 = arith.constant 0 : i32
    return %c0_i32, %c0_i32_0 : i32, i32
  }
  func.func @transform_2(%arg0: i32, %arg1: i32) -> (i32, i32, i32) {
    %c0_i32 = arith.constant 0 : i32
    %c0_i32_0 = arith.constant 0 : i32
    %c0_i32_1 = arith.constant 0 : i32
    return %c0_i32, %arg1, %c0_i32_0 : i32, i32, i32
  }
  func.func @transform_3(%arg0: i32, %arg1: i32) -> (i32, i32, i32) {
    %c0_i32 = arith.constant 0 : i32
    %c0_i32_0 = arith.constant 0 : i32
    return %arg0, %arg1, %c0_i32 : i32, i32, i32
  }
}

</mosaic_0001>

<llo_original>
// kernel: tpu_custom_call.1
$region0: #{tpu_custom_call.1}
  #allocation0 [shape = 'u32[]', space=smem, size = 0x4, offset = 0x4, fixed_abs, tag = 'smem constant byte address 0x4 - core index']
  #allocation1 [shape = 'u32[144,128]{1,0:T(1,128)}', space=vmem, size = 0x12000, scoped, tag = 'internal scratch']
  #allocation2 [shape = 'f32[8,32]{1,0:T(8,128)}', space=vmem, size = 0x1000, scoped, tag = 'scratch operand']
  %s0 = inlined_call_operand.hbm [shape: f32[2,8,32], index: 0, kind: input, shape index: {}]
  %s1 = inlined_call_operand.hbm [shape: f32[32,32], index: 1, kind: input, shape index: {}]
  %s2 = inlined_call_operand.hbm [shape: f32[2,8,8], index: 2, kind: input, shape index: {}]
  %s3 = inlined_call_operand.hbm [shape: f32[2,8,32], index: 3, kind: output, shape index: {}]
  %s4 = sld [smem:[#allocation0]]
  $region61: #{tpu_custom_call.1} parent=0
    _
  %s6 = ssub.s32 1, %s4
  %s7 = scalar_select 0, %s6, %s4
  $region1: #{tpu_custom_call.1} parent=0
    #allocation3 [shape = 'u8[8192]{0}', space=vmem, size = 0x2000, scoped, tag = 'input window, operand 0']
    #allocation4 [shape = 's32[2]{0}', space=sflag, size = 0x8, scoped, tag = 'scoped memory for tpu_custom_call.1']
    #allocation5 [shape = 's32[2]{0}', space=sflag, size = 0x8, scoped, tag = 'scoped memory for tpu_custom_call.1']
    #allocation6 [shape = 'u8[16384]{0}', space=vmem, size = 0x4000, scoped, tag = 'input window, operand 1, single buffered']
    #allocation7 [shape = 's32[1]{0}', space=sflag, size = 0x4, scoped, tag = 'scoped memory for tpu_custom_call.1']
    #allocation8 [shape = 'u8[8192]{0}', space=vmem, size = 0x2000, scoped, tag = 'input window, operand 2, single buffered']
    #allocation9 [shape = 'u8[8192]{0}', space=vmem, size = 0x2000, scoped, tag = 'output window, operand 0']
    %8 = vsyncpa [#allocation4], 0
    %s9 = scalar_lea.sflag [#allocation4], 1
    %10 = vsyncpa %s9, 0
    %11 = vsyncpa [#allocation7], 0
    %12 = vsyncpa [#allocation5], 0
    %s13 = scalar_lea.sflag [#allocation5], 1
    %14 = vsyncpa %s13, 0
    loop: start=0, step=1, limit=4
    $region2: #{tpu_custom_call.1} parent=1 // loop_pre_header
      _
    $region3: #{tpu_custom_call.1} parent=1 // loop_header
      %s16 = sphi 0, %s20
      %p17 = scmp.ge.s32.totalorder %s16, 4
      %s23 = sphi 0, %s35
      %s24 = sphi 0, %s31
      %s25 = sphi 0, %s23
      %s26 = sphi 0, %s24
      %s27 = sphi 0, %s25
      %s28 = sphi 0, %s26
      %s38 = sphi 0, %s40
      %s41 = sphi 0, %s38
      %s42 = sphi 0, %s41
      %s58 = sphi 0, %s42
      %s62 = sphi 0, %s62
      %s64 = sphi 0, %s62
      %s65 = sphi 0, %s64
      %s79 = sphi 0, %s65
      %s85 = sphi 0, %s87
      %s88 = sphi 0, %s85
      %s89 = sphi 0, %s88
      %s105 = sphi 0, %s89
      %s113 = sphi 0, %s115
      %s116 = sphi 0, %s113
      %s117 = sphi 0, %s116
      %s133 = sphi 0, %s117
    $region4: #{tpu_custom_call.1} parent=1 // loop_header_branch
      %19 = sbr.rel (%p17) target = $region8
    $region5: #{tpu_custom_call.1} parent=1 // loop_body
      %s21 = ssub.s32 %s16, 1
      %s22 = ssub.s32 %s16, 2
      %s29 = sadd.s32 1, %s24
      %p30 = scmp.ge.s32.totalorder %s29, 1
      %s31 = scalar_select %p30, 0, %s29
      %s32 = sadd.s32 1, %s23
      %s33 = scalar_select %p30, %s32, %s23
      %p34 = scmp.ge.s32.totalorder %s33, 2
      %s35 = scalar_select %p34, 0, %s33
      %s36 = ssub.s32 %s23, %s35
      %p37 = scmp.eq.s32.totalorder %s36, 0
      %s39 = sadd.s32 %s38, 1
      %s40 = scalar_select %p37, %s38, %s39
      %p43 = pneg %p37
      %p44 = scmp.eq.s32.totalorder %s16, 1
      %p45 = por %p43, %p44
      %p46 = scmp.ne.s32.totalorder %s38, %s41
      %p47 = scmp.eq.s32.totalorder %s16, 0
      %p48 = por %p46, %p47
      %p49 = scmp.ne.s32.totalorder %s38, %s41
      %p50 = scmp.eq.s32.totalorder %s21, 1
      %p51 = por %p49, %p50
      %p52 = scmp.ne.s32.totalorder %s41, %s42
      %p53 = scmp.eq.s32.totalorder %s21, 0
      %p54 = por %p52, %p53
      %p55 = scmp.ne.s32.totalorder %s41, %s42
      %p56 = scmp.eq.s32.totalorder %s22, 1
      %p57 = por %p55, %p56
      %p59 = scmp.ne.s32.totalorder %s42, %s58
      %p60 = scmp.eq.s32.totalorder %s22, 0
      %p61 = por %p59, %p60
      %s63 = sadd.s32 %s62, 1
      %p66 = scmp.eq.s32.totalorder %s16, 1
      %p67 = scmp.ne.s32.totalorder %s62, %s64
      %p68 = scmp.eq.s32.totalorder %s16, 0
      %p69 = por %p67, %p68
      %p70 = scmp.ne.s32.totalorder %s62, %s64
      %p71 = scmp.eq.s32.totalorder %s21, 1
      %p72 = por %p70, %p71
      %p73 = scmp.ne.s32.totalorder %s64, %s65
      %p74 = scmp.eq.s32.totalorder %s21, 0
      %p75 = por %p73, %p74
      %p76 = scmp.ne.s32.totalorder %s64, %s65
      %p77 = scmp.eq.s32.totalorder %s22, 1
      %p78 = por %p76, %p77
      %p80 = scmp.ne.s32.totalorder %s65, %s79
      %p81 = scmp.eq.s32.totalorder %s22, 0
      %p82 = por %p80, %p81
      %s83 = ssub.s32 %s24, %s31
      %p84 = scmp.eq.s32.totalorder %s83, 0
      %s86 = sadd.s32 %s85, 1
      %s87 = scalar_select %p84, %s85, %s86
      %p90 = pneg %p84
      %p91 = scmp.eq.s32.totalorder %s16, 1
      %p92 = por %p90, %p91
      %p93 = scmp.ne.s32.totalorder %s85, %s88
      %p94 = scmp.eq.s32.totalorder %s16, 0
      %p95 = por %p93, %p94
      %p96 = scmp.ne.s32.totalorder %s85, %s88
      %p97 = scmp.eq.s32.totalorder %s21, 1
      %p98 = por %p96, %p97
      %p99 = scmp.ne.s32.totalorder %s88, %s89
      %p100 = scmp.eq.s32.totalorder %s21, 0
      %p101 = por %p99, %p100
      %p102 = scmp.ne.s32.totalorder %s88, %s89
      %p103 = scmp.eq.s32.totalorder %s22, 1
      %p104 = por %p102, %p103
      %p106 = scmp.ne.s32.totalorder %s89, %s105
      %p107 = scmp.eq.s32.totalorder %s22, 0
      %p108 = por %p106, %p107
      %s109 = ssub.s32 %s23, %s35
      %s110 = ssub.s32 %s24, %s31
      %s111 = sor.u32 %s109, %s110
      %p112 = scmp.eq.s32.totalorder %s111, 0
      %s114 = sadd.s32 %s113, 1
      %s115 = scalar_select %p112, %s113, %s114
      %p118 = pneg %p112
      %p119 = scmp.eq.s32.totalorder %s16, 1
      %p120 = por %p118, %p119
      %p121 = scmp.ne.s32.totalorder %s113, %s116
      %p122 = scmp.eq.s32.totalorder %s16, 0
      %p123 = por %p121, %p122
      %p124 = scmp.ne.s32.totalorder %s113, %s116
      %p125 = scmp.eq.s32.totalorder %s21, 1
      %p126 = por %p124, %p125
      %p127 = scmp.ne.s32.totalorder %s116, %s117
      %p128 = scmp.eq.s32.totalorder %s21, 0
      %p129 = por %p127, %p128
      %p130 = scmp.ne.s32.totalorder %s116, %s117
      %p131 = scmp.eq.s32.totalorder %s22, 1
      %p132 = por %p130, %p131
      %p134 = scmp.ne.s32.totalorder %s117, %s133
      %p135 = scmp.eq.s32.totalorder %s22, 0
      %p136 = por %p134, %p135
      %p137 = scmp.le.s32.totalorder 1, %s16
      %p138 = scmp.lt.s32.totalorder %s16, 3
      %p139 = pnand %p137, %p138
      %p140 = pneg %p139
      // Predicated region
      $region9: #{tpu_custom_call.1} parent=5 // pred_check
        _
      $region10: #{tpu_custom_call.1} parent=5 // pred_check_branch
        %142 = sbr.rel (%p139) target = $region12
      $region11: #{tpu_custom_call.1} parent=5 // pred_region
        %s143 = ssub.s32 %s16, 1
        // Predicated region
        $region13: #{tpu_custom_call.1} parent=11 // pred_check
          %p144 = pneg %p75
        $region14: #{tpu_custom_call.1} parent=11 // pred_check_branch
          %146 = sbr.rel (%p144) target = $region16
        $region15: #{tpu_custom_call.1} parent=11 // pred_region
          %s148 = ssub.s32 512, 512
          %149 = vsyncadd [#allocation7], %s148
          %s150 = sshll.u32 [#allocation6], 4
          %s151 = int_to_ptr.vmem [resolvable:$true] %s150
          %156 = dma.hbm_to_vmem [thread:$0]  %s1, 512, %s151, [#allocation7], 128, 128, 8
        $region16: #{tpu_custom_call.1} parent=11 // pred_fallthru
          _
        // Predicated region
        $region17: #{tpu_custom_call.1} parent=11 // pred_check
          %p157 = pneg %p101
        $region18: #{tpu_custom_call.1} parent=11 // pred_check_branch
          %159 = sbr.rel (%p157) target = $region20
        $region19: #{tpu_custom_call.1} parent=11 // pred_region
          %s161 = ssub.s32 256, 256
          %162 = vsyncadd [#allocation7], %s161
          %s163 = smul.addr %s26, 128
          %s164 = scalar_lea.hbm %s2, %s163
          %s165 = sshll.u32 [#allocation8], 4
          %s166 = int_to_ptr.vmem [resolvable:$true] %s165
          %171 = dma.hbm_to_vmem [thread:$0]  %s164, 256, %s166, [#allocation7], 128, 128, 8
        $region20: #{tpu_custom_call.1} parent=11 // pred_fallthru
          _
      $region12: #{tpu_custom_call.1} parent=5 // pred_fallthru
        _
      %p172 = scmp.lt.s32.totalorder %s16, 2
      // Predicated region
      $region21: #{tpu_custom_call.1} parent=5 // pred_check
        %p173 = pneg %p172
      $region22: #{tpu_custom_call.1} parent=5 // pred_check_branch
        %175 = sbr.rel (%p173) target = $region24
      $region23: #{tpu_custom_call.1} parent=5 // pred_region
        // Predicated region
        $region25: #{tpu_custom_call.1} parent=23 // pred_check
          %p176 = pneg %p48
        $region26: #{tpu_custom_call.1} parent=23 // pred_check_branch
          %178 = sbr.rel (%p176) target = $region28
        $region27: #{tpu_custom_call.1} parent=23 // pred_region
          %s179 = sand.u32 %s38, 1
          %s180 = scalar_lea.sflag [#allocation4], %s179
          %s181 = sand.u32 %s38, 1
          %s182 = smul.addr %s181, 8
          %s183 = scalar_lea.vmem [#allocation3], %s182
          %s185 = ssub.s32 128, 128
          %186 = vsyncadd %s180, %s185
          %s187 = smul.addr %s23, 128
          %s188 = scalar_lea.hbm %s0, %s187
          %s190 = sshll.u32 %s183, 4
          %s191 = int_to_ptr.vmem [resolvable:$true] %s190
          %193 = dma.hbm_to_vmem [thread:$0]  %s188, 128, %s191, %s180
        $region28: #{tpu_custom_call.1} parent=23 // pred_fallthru
          _
      $region24: #{tpu_custom_call.1} parent=5 // pred_fallthru
        _
      %p194 = scmp.le.s32.totalorder 1, %s16
      %p195 = scmp.lt.s32.totalorder %s16, 3
      %p196 = pnand %p194, %p195
      %p197 = pneg %p196
      // Predicated region
      $region29: #{tpu_custom_call.1} parent=5 // pred_check
        _
      $region30: #{tpu_custom_call.1} parent=5 // pred_check_branch
        %199 = sbr.rel (%p196) target = $region32
      $region31: #{tpu_custom_call.1} parent=5 // pred_region
        %s200 = ssub.s32 %s16, 1
        %s201 = sand.u32 %s41, 1
        %s202 = scalar_lea.sflag [#allocation4], %s201
        %s203 = sand.u32 %s41, 1
        %s204 = smul.addr %s203, 8
        %s205 = scalar_lea.vmem [#allocation3], %s204
        // Predicated region
        $region33: #{tpu_custom_call.1} parent=31 // pred_check
          %p206 = pneg %p54
        $region34: #{tpu_custom_call.1} parent=31 // pred_check_branch
          %208 = sbr.rel (%p206) target = $region36
        $region35: #{tpu_custom_call.1} parent=31 // pred_region
          %209 = dma.done %s202, 128
        $region36: #{tpu_custom_call.1} parent=31 // pred_fallthru
          _
        // Predicated region
        $region37: #{tpu_custom_call.1} parent=31 // pred_check
          %p210 = pneg %p75
        $region38: #{tpu_custom_call.1} parent=31 // pred_check_branch
          %212 = sbr.rel (%p210) target = $region40
        $region39: #{tpu_custom_call.1} parent=31 // pred_region
          %213 = dma.done [#allocation7], 512
        $region40: #{tpu_custom_call.1} parent=31 // pred_fallthru
          _
        // Predicated region
        $region41: #{tpu_custom_call.1} parent=31 // pred_check
          %p214 = pneg %p101
        $region42: #{tpu_custom_call.1} parent=31 // pred_check_branch
          %216 = sbr.rel (%p214) target = $region44
        $region43: #{tpu_custom_call.1} parent=31 // pred_region
          %217 = dma.done [#allocation7], 256
        $region44: #{tpu_custom_call.1} parent=31 // pred_fallthru
          _
        %s218 = sand.u32 %s41, 1
        %s219 = scalar_lea.sflag [#allocation4], %s218
        %s220 = sand.u32 %s41, 1
        %s221 = smul.addr %s220, 8
        %s222 = scalar_lea.vmem [#allocation3], %s221
        %p223 = pneg %p54
        %p224 = pneg %p51
        %p225 = pneg %p75
        %p226 = pneg %p72
        %p227 = pneg %p101
        %p228 = pneg %p98
        %p229 = pneg %p129
        %p230 = pneg %p126
        %s231 = sand.u32 %s116, 1
        %s232 = scalar_lea.sflag [#allocation5], %s231
        %s233 = sand.u32 %s116, 1
        %s234 = smul.addr %s233, 8
        %s235 = scalar_lea.vmem [#allocation9], %s234
        %p236 = scmp.eq.s32.totalorder %s26, 0
        // Predicated region
        $region45: #{tpu_custom_call.1} parent=31 // pred_check
          %p237 = pneg %p236
        $region46: #{tpu_custom_call.1} parent=31 // pred_check_branch
          %239 = sbr.rel (%p237) target = $region48
        $region47: #{tpu_custom_call.1} parent=31 // pred_region
          %v240 = vld [vmem:[%s205] sm:$0xff]
          %v241 = vld [vmem:[#allocation6] sm:$0xff]
          %v242 = vld [vmem:[#allocation6 + $0x8] sm:$0xff]
          %v243 = vld [vmem:[#allocation6 + $0x10] sm:$0xff]
          %v244 = vld [vmem:[#allocation6 + $0x18] sm:$0xff]
          %vm245 = vcmask 261120
          %v247 = vsel %vm245, %v240, 0
          %249 = vmatprep.subr.mxu0 0.0
          %250 = vmatpush1.msra.mxu0 %v241
          %251 = vmatprep.subr.mxu0 0.0
          %252 = vmatpush1.msra.mxu0 %v242
          %253 = vmatprep.subr.mxu0 0.0
          %254 = vmatpush1.msra.mxu0 %v243
          %255 = vmatprep.subr.mxu0 0.0
          %256 = vmatpush1.msra.mxu0 %v244
          %257 = vmatprep.subr.mxu0 0.0
          %258 = vmatpush1.msra.mxu0 0.0
          %259 = vmatprep.subr.mxu0 0.0
          %260 = vmatpush1.msra.mxu0 0.0
          %261 = vmatprep.subr.mxu0 0.0
          %262 = vmatpush1.msra.mxu0 0.0
          %263 = vmatprep.subr.mxu0 0.0
          %264 = vmatpush1.msra.mxu0 0.0
          %265 = vmatprep.subr.mxu0 0.0
          %266 = vmatpush1.msra.mxu0 0.0
          %267 = vmatprep.subr.mxu0 0.0
          %268 = vmatpush1.msra.mxu0 0.0
          %269 = vmatprep.subr.mxu0 0.0
          %270 = vmatpush1.msra.mxu0 0.0
          %271 = vmatprep.subr.mxu0 0.0
          %272 = vmatpush1.msra.mxu0 0.0
          %273 = vmatprep.subr.mxu0 0.0
          %274 = vmatpush1.msra.mxu0 0.0
          %275 = vmatprep.subr.mxu0 0.0
          %276 = vmatpush1.msra.mxu0 0.0
          %277 = vmatprep.subr.mxu0 0.0
          %278 = vmatpush1.msra.mxu0 0.0
          %279 = vmatprep.subr.mxu0 0.0
          %280 = vmatpush1.msra.mxu0 0.0
          %281 = vmatprep.subr.mxu0 0.0
          %282 = vmatpush1.msra.mxu0 0.0
          %283 = vmatprep.subr.mxu0 0.0
          %284 = vmatpush1.msra.mxu0 0.0
          %285 = vmatprep.subr.mxu0 0.0
          %286 = vmatpush1.msra.mxu0 0.0
          %287 = vmatprep.subr.mxu0 0.0
          %288 = vmatpush1.msra.mxu0 0.0
          %289 = vmatprep.subr.mxu0 0.0
          %290 = vmatpush1.msra.mxu0 0.0
          %291 = vmatprep.subr.mxu0 0.0
          %292 = vmatpush1.msra.mxu0 0.0
          %293 = vmatprep.subr.mxu0 0.0
          %294 = vmatpush1.msra.mxu0 0.0
          %295 = vmatprep.subr.mxu0 0.0
          %296 = vmatpush1.msra.mxu0 0.0
          %297 = vmatprep.subr.mxu0 0.0
          %298 = vmatpush1.msra.mxu0 0.0
          %299 = vmatprep.subr.mxu0 0.0
          %300 = vmatpush1.msra.mxu0 0.0
          %301 = vmatprep.subr.mxu0 0.0
          %302 = vmatpush1.msra.mxu0 0.0
          %303 = vmatprep.subr.mxu0 0.0
          %304 = vmatpush1.msra.mxu0 0.0
          %305 = vmatprep.subr.mxu0 0.0
          %306 = vmatpush1.msra.mxu0 0.0
          %307 = vmatprep.subr.mxu0 0.0
          %308 = vmatpush1.msra.mxu0 0.0
          %309 = vmatprep.subr.mxu0 0.0
          %310 = vmatpush1.msra.mxu0 0.0
          %311 = vmatprep.subr.mxu0 0.0
          %312 = vmatpush1.msra.mxu0 0.0
          %313 = vmatprep.mubr.f32.mxu0 0.0
          %314 = vmatmul.mubr.f32.gmra.mrb[0].mxu0 %v247
          %v315 = vpop.f32.mrb[0].mxu0
          %v316 = vadd.f32 0.0, %v315
          %v317 = vpop.f32.mrb[0].mxu0
          %318 = vdwg.mxu0
          %319 = vst.msk [vmem:[#allocation2] sm:$0xff] %vm245, %v316
        $region48: #{tpu_custom_call.1} parent=31 // pred_fallthru
          _
        %v320 = vld [vmem:[#allocation2] sm:$0xff]
        %v321 = vld [vmem:[#allocation8] sm:$0xff]
        %vm322 = vcmask 64512
        %v324 = vsel %vm322, %v321, 0
        %326 = vmatprep.subr.mxu0 0.0
        %327 = vmatpush1.msra.mxu0 %v320
        %328 = vmatprep.subr.mxu0 0.0
        %329 = vmatpush1.msra.mxu0 0.0
        %330 = vmatprep.subr.mxu0 0.0
        %331 = vmatpush1.msra.mxu0 0.0
        %332 = vmatprep.subr.mxu0 0.0
        %333 = vmatpush1.msra.mxu0 0.0
        %334 = vmatprep.subr.mxu0 0.0
        %335 = vmatpush1.msra.mxu0 0.0
        %336 = vmatprep.subr.mxu0 0.0
        %337 = vmatpush1.msra.mxu0 0.0
        %338 = vmatprep.subr.mxu0 0.0
        %339 = vmatpush1.msra.mxu0 0.0
        %340 = vmatprep.subr.mxu0 0.0
        %341 = vmatpush1.msra.mxu0 0.0
        %342 = vmatprep.subr.mxu0 0.0
        %343 = vmatpush1.msra.mxu0 0.0
        %344 = vmatprep.subr.mxu0 0.0
        %345 = vmatpush1.msra.mxu0 0.0
        %346 = vmatprep.subr.mxu0 0.0
        %347 = vmatpush1.msra.mxu0 0.0
        %348 = vmatprep.subr.mxu0 0.0
        %349 = vmatpush1.msra.mxu0 0.0
        %350 = vmatprep.subr.mxu0 0.0
        %351 = vmatpush1.msra.mxu0 0.0
        %352 = vmatprep.subr.mxu0 0.0
        %353 = vmatpush1.msra.mxu0 0.0
        %354 = vmatprep.subr.mxu0 0.0
        %355 = vmatpush1.msra.mxu0 0.0
        %356 = vmatprep.subr.mxu0 0.0
        %357 = vmatpush1.msra.mxu0 0.0
        %358 = vmatprep.subr.mxu0 0.0
        %359 = vmatpush1.msra.mxu0 0.0
        %360 = vmatprep.subr.mxu0 0.0
        %361 = vmatpush1.msra.mxu0 0.0
        %362 = vmatprep.subr.mxu0 0.0
        %363 = vmatpush1.msra.mxu0 0.0
        %364 = vmatprep.subr.mxu0 0.0
        %365 = vmatpush1.msra.mxu0 0.0
        %366 = vmatprep.subr.mxu0 0.0
        %367 = vmatpush1.msra.mxu0 0.0
        %368 = vmatprep.subr.mxu0 0.0
        %369 = vmatpush1.msra.mxu0 0.0
        %370 = vmatprep.subr.mxu0 0.0
        %371 = vmatpush1.msra.mxu0 0.0
        %372 = vmatprep.subr.mxu0 0.0
        %373 = vmatpush1.msra.mxu0 0.0
        %374 = vmatprep.subr.mxu0 0.0
        %375 = vmatpush1.msra.mxu0 0.0
        %376 = vmatprep.subr.mxu0 0.0
        %377 = vmatpush1.msra.mxu0 0.0
        %378 = vmatprep.subr.mxu0 0.0
        %379 = vmatpush1.msra.mxu0 0.0
        %380 = vmatprep.subr.mxu0 0.0
        %381 = vmatpush1.msra.mxu0 0.0
        %382 = vmatprep.subr.mxu0 0.0
        %383 = vmatpush1.msra.mxu0 0.0
        %384 = vmatprep.subr.mxu0 0.0
        %385 = vmatpush1.msra.mxu0 0.0
        %386 = vmatprep.subr.mxu0 0.0
        %387 = vmatpush1.msra.mxu0 0.0
        %388 = vmatprep.subr.mxu0 0.0
        %389 = vmatpush1.msra.mxu0 0.0
        %390 = vmatprep.mubr.f32.mxu0 0.0
        %391 = vmatmul.mubr.f32.gmra.mrb[0].mxu0 %v324
        %v392 = vpop.f32.mrb[0].mxu0
        %v393 = vadd.f32 0.0, %v392
        %v394 = vpop.f32.mrb[0].mxu0
        %395 = vdwg.mxu0
        %vm396 = vcmask 130048
        %397 = vst.msk [vmem:[%s235] sm:$0xff] %vm396, %v393
        %s398 = scalar_lea.vmem [#allocation8], 8
        %v399 = vld [vmem:[%s398] sm:$0xff]
        %401 = vrot.lane.b32.xlu0 %v320, 112
        %v402 = vpop.permute.xlu0 %401
        %v405 = vsel %vm322, %v399, 0
        %407 = vmatprep.subr.mxu0 0.0
        %408 = vmatpush1.msra.mxu0 %v402
        %409 = vmatprep.subr.mxu0 0.0
        %410 = vmatpush1.msra.mxu0 0.0
        %411 = vmatprep.subr.mxu0 0.0
        %412 = vmatpush1.msra.mxu0 0.0
        %413 = vmatprep.subr.mxu0 0.0
        %414 = vmatpush1.msra.mxu0 0.0
        %415 = vmatprep.subr.mxu0 0.0
        %416 = vmatpush1.msra.mxu0 0.0
        %417 = vmatprep.subr.mxu0 0.0
        %418 = vmatpush1.msra.mxu0 0.0
        %419 = vmatprep.subr.mxu0 0.0
        %420 = vmatpush1.msra.mxu0 0.0
        %421 = vmatprep.subr.mxu0 0.0
        %422 = vmatpush1.msra.mxu0 0.0
        %423 = vmatprep.subr.mxu0 0.0
        %424 = vmatpush1.msra.mxu0 0.0
        %425 = vmatprep.subr.mxu0 0.0
        %426 = vmatpush1.msra.mxu0 0.0
        %427 = vmatprep.subr.mxu0 0.0
        %428 = vmatpush1.msra.mxu0 0.0
        %429 = vmatprep.subr.mxu0 0.0
        %430 = vmatpush1.msra.mxu0 0.0
        %431 = vmatprep.subr.mxu0 0.0
        %432 = vmatpush1.msra.mxu0 0.0
        %433 = vmatprep.subr.mxu0 0.0
        %434 = vmatpush1.msra.mxu0 0.0
        %435 = vmatprep.subr.mxu0 0.0
        %436 = vmatpush1.msra.mxu0 0.0
        %437 = vmatprep.subr.mxu0 0.0
        %438 = vmatpush1.msra.mxu0 0.0
        %439 = vmatprep.subr.mxu0 0.0
        %440 = vmatpush1.msra.mxu0 0.0
        %441 = vmatprep.subr.mxu0 0.0
        %442 = vmatpush1.msra.mxu0 0.0
        %443 = vmatprep.subr.mxu0 0.0
        %444 = vmatpush1.msra.mxu0 0.0
        %445 = vmatprep.subr.mxu0 0.0
        %446 = vmatpush1.msra.mxu0 0.0
        %447 = vmatprep.subr.mxu0 0.0
        %448 = vmatpush1.msra.mxu0 0.0
        %449 = vmatprep.subr.mxu0 0.0
        %450 = vmatpush1.msra.mxu0 0.0
        %451 = vmatprep.subr.mxu0 0.0
        %452 = vmatpush1.msra.mxu0 0.0
        %453 = vmatprep.subr.mxu0 0.0
        %454 = vmatpush1.msra.mxu0 0.0
        %455 = vmatprep.subr.mxu0 0.0
        %456 = vmatpush1.msra.mxu0 0.0
        %457 = vmatprep.subr.mxu0 0.0
        %458 = vmatpush1.msra.mxu0 0.0
        %459 = vmatprep.subr.mxu0 0.0
        %460 = vmatpush1.msra.mxu0 0.0
        %461 = vmatprep.subr.mxu0 0.0
        %462 = vmatpush1.msra.mxu0 0.0
        %463 = vmatprep.subr.mxu0 0.0
        %464 = vmatpush1.msra.mxu0 0.0
        %465 = vmatprep.subr.mxu0 0.0
        %466 = vmatpush1.msra.mxu0 0.0
        %467 = vmatprep.subr.mxu0 0.0
        %468 = vmatpush1.msra.mxu0 0.0
        %469 = vmatprep.subr.mxu0 0.0
        %470 = vmatpush1.msra.mxu0 0.0
        %471 = vmatprep.mubr.f32.mxu0 0.0
        %472 = vmatmul.mubr.f32.gmra.mrb[0].mxu0 %v405
        %v473 = vpop.f32.mrb[0].mxu0
        %v474 = vadd.f32 0.0, %v473
        %v475 = vpop.f32.mrb[0].mxu0
        %476 = vdwg.mxu0
        %478 = vrot.lane.b32.xlu0 %v474, 16
        %v479 = vpop.permute.xlu0 %478
        %vm481 = vcmask 261248
        %482 = vst.msk [vmem:[%s235] sm:$0xff] %vm481, %v479
        %s483 = sand.u32 %s116, 1
        %s484 = scalar_lea.sflag [#allocation5], %s483
        %s485 = sand.u32 %s116, 1
        %s486 = smul.addr %s485, 8
        %s487 = scalar_lea.vmem [#allocation9], %s486
        // Predicated region
        $region49: #{tpu_custom_call.1} parent=31 // pred_check
          %p488 = pneg %p126
        $region50: #{tpu_custom_call.1} parent=31 // pred_check_branch
          %490 = sbr.rel (%p488) target = $region52
        $region51: #{tpu_custom_call.1} parent=31 // pred_region
          %s492 = ssub.s32 128, 128
          %493 = vsyncadd %s484, %s492
          %s494 = sadd.s32 %s26, %s25
          %s495 = smul.addr %s494, 128
          %s496 = scalar_lea.hbm %s3, %s495
          %s498 = sshll.u32 %s487, 4
          %s499 = int_to_ptr.vmem [resolvable:$true] %s498
          %501 = dma.vmem_to_hbm [thread:$0]  %s499, 128, %s496, %s484
        $region52: #{tpu_custom_call.1} parent=31 // pred_fallthru
          _
      $region32: #{tpu_custom_call.1} parent=5 // pred_fallthru
        _
      %p502 = scmp.le.s32.totalorder 2, %s16
      // Predicated region
      $region53: #{tpu_custom_call.1} parent=5 // pred_check
        %p503 = pneg %p502
      $region54: #{tpu_custom_call.1} parent=5 // pred_check_branch
        %505 = sbr.rel (%p503) target = $region56
      $region55: #{tpu_custom_call.1} parent=5 // pred_region
        %s506 = ssub.s32 %s16, 2
        // Predicated region
        $region57: #{tpu_custom_call.1} parent=55 // pred_check
          %p507 = pneg %p132
        $region58: #{tpu_custom_call.1} parent=55 // pred_check_branch
          %509 = sbr.rel (%p507) target = $region60
        $region59: #{tpu_custom_call.1} parent=55 // pred_region
          %s510 = sand.u32 %s117, 1
          %s511 = scalar_lea.sflag [#allocation5], %s510
          %s512 = sand.u32 %s117, 1
          %s513 = smul.addr %s512, 8
          %s514 = scalar_lea.vmem [#allocation9], %s513
          %515 = dma.done %s511, 128
        $region60: #{tpu_custom_call.1} parent=55 // pred_fallthru
          _
      $region56: #{tpu_custom_call.1} parent=5 // pred_fallthru
        _
    $region6: #{tpu_custom_call.1} parent=1 // loop_footer
      %s20 = sadd.s32 1, %s16
    $region7: #{tpu_custom_call.1} parent=1 // loop_footer_branch
      %15 = sbr.rel target = $region3
    $region8: #{tpu_custom_call.1} parent=1 // loop_exit
      _
    %516 = vsyncpa [#allocation4], 1
    %s517 = scalar_lea.sflag [#allocation4], 1
    %518 = vsyncpa %s517, 1
    %519 = vsyncpa [#allocation7], 1
    %520 = vsyncpa [#allocation5], 1
    %s521 = scalar_lea.sflag [#allocation5], 1
    %522 = vsyncpa %s521, 1

</llo_original>
